<compile_context>
chip_gen: v7x
topology: tpu7x:2x2x1
jax: 0.10.0
libtpu: 0.0.40
codegen_flags: <defaults>
</compile_context>

<pallas_src>
import functools

import jax
import jax.numpy as jnp
from jax.experimental import pallas as pl
from jax.experimental.pallas import tpu as pltpu

POSTERIOR_STD_BIAS = 0.1


def _posterior_kernel(s_ref, w1_ref, b1_ref, wh_ref, bh_ref, mu_ref, sig_ref):
    # s tile: (tm, p*s_dim); packed weights are resident (pinned block 0).
    s = s_ref[...]
    if s.dtype != jnp.float32:
        s = s.astype(jnp.float32)

    # hidden = relu(s @ blockdiag(W1) + tile(b1))  -- MXU matmul, K = p*s_dim
    hidden = jnp.dot(s, w1_ref[...], preferred_element_type=jnp.float32)
    hidden = jnp.maximum(hidden + b1_ref[...], 0.0)

    # Fused heads: one matmul producing [mu | sigma_logits], each p*z wide.
    heads = jnp.dot(hidden, wh_ref[...], preferred_element_type=jnp.float32)
    heads = heads + bh_ref[...]

    half = mu_ref.shape[-1]  # p * z_dim (static; 128-lane aligned slice)
    mu_ref[...] = heads[:, :half].astype(mu_ref.dtype)
    sig_ref[...] = (POSTERIOR_STD_BIAS
                    + 0.9 * jax.nn.sigmoid(heads[:, half:])).astype(sig_ref.dtype)


@functools.partial(jax.jit, static_argnames=("pack", "block_rows"))
def latent_normal_posterior_encoder(s, w1, b1, wmu, bmu, wsig, bsig,
                                    pack=8, block_rows=512):
    """Returns (mu, sigma) of the Normal posterior q(z|s).

    s    : (B, s_dim) float32
    w1   : (s_dim, s_dim), b1: (1, s_dim)
    wmu  : (s_dim, z_dim), bmu: (1, z_dim)
    wsig : (s_dim, z_dim), bsig: (1, z_dim)
    pack : batch rows folded into lanes (8 fills 128 lanes at z_dim=16;
           4 is enough to match v5e's 128-wide MXU if desired).
    """
    B, s_dim = s.shape
    z_dim = wmu.shape[1]
    p = pack

    # --- lane packing: fold p batch rows into lanes --------------------------
    # Pad B up to a multiple of p only if needed (this copies s; it is only
    # hit when B % p != 0).
    B_pad = pl.cdiv(B, p) * p
    if B_pad != B:
        s = jnp.pad(s, ((0, B_pad - B), (0, 0)))
    Bp = B_pad // p
    s_packed = s.reshape(Bp, p * s_dim)  # packed row r = raw rows [p*r, p*r+p)

    f32 = jnp.float32
    eye = jnp.eye(p, dtype=f32)
    # Block-diagonal weights / tiled biases (tiny: <= 256x256 f32).
    w1_blk = jnp.kron(eye, w1.astype(f32))                       # (p*s, p*s)
    b1_t = jnp.tile(b1.astype(f32), (1, p))                      # (1, p*s)
    wh_blk = jnp.concatenate([jnp.kron(eye, wmu.astype(f32)),
                              jnp.kron(eye, wsig.astype(f32))],
                             axis=1)                             # (p*s, 2*p*z)
    bh_t = jnp.concatenate([jnp.tile(bmu.astype(f32), (1, p)),
                            jnp.tile(bsig.astype(f32), (1, p))],
                           axis=1)                               # (1, 2*p*z)

    pk = p * s_dim          # packed contraction width (256 at p=8, s_dim=32)
    pz = p * z_dim          # packed head width        (128 at p=8, z_dim=16)

    # --- batch tiling ---------------------------------------------------------
    if Bp <= 8:
        tm = Bp             # single block (full-dim rule)
    else:
        # Multiple-of-8 sublane tile, grid length >= 2 (feeds both TCs on
        # v7x), capped at block_rows packed rows (~block_rows*p raw rows,
        # ~1 MB of HBM traffic per grid step at the default 512).
        tm = min(block_rows, pl.cdiv(pl.cdiv(Bp, 2), 8) * 8)
    grid = (pl.cdiv(Bp, tm),)   # Pallas masks the ragged last block

    cost = pl.CostEstimate(
        flops=2 * Bp * pk * (pk + 2 * pz),
        transcendentals=Bp * pz,
        bytes_accessed=4 * (Bp * pk + pk * pk + pk + pk * 2 * pz + 2 * pz
                            + 2 * Bp * pz),
    )

    mu_p, sig_p = pl.pallas_call(
        _posterior_kernel,
        out_shape=(jax.ShapeDtypeStruct((Bp, pz), jnp.float32),
                   jax.ShapeDtypeStruct((Bp, pz), jnp.float32)),
        grid_spec=pltpu.PrefetchScalarGridSpec(
            num_scalar_prefetch=0,
            grid=grid,
            in_specs=[
                pl.BlockSpec((tm, pk), lambda i: (i, 0)),       # packed s tile
                pl.BlockSpec((pk, pk), lambda i: (0, 0)),       # W1 block-diag
                pl.BlockSpec((1, pk), lambda i: (0, 0)),        # b1 tiled
                pl.BlockSpec((pk, 2 * pz), lambda i: (0, 0)),   # [Wmu|Wsig] blk
                pl.BlockSpec((1, 2 * pz), lambda i: (0, 0)),    # [bmu|bsig]
            ],
            out_specs=[
                pl.BlockSpec((tm, pz), lambda i: (i, 0)),       # mu (128-lane)
                pl.BlockSpec((tm, pz), lambda i: (i, 0)),       # sigma (128-lane)
            ],
        ),
        compiler_params=pltpu.CompilerParams(
            dimension_semantics=("parallel",)),
        cost_estimate=cost,
    )(s_packed, w1_blk, b1_t, wh_blk, bh_t)

    # Unpack: packed row r holds raw rows [p*r, p*r+p) contiguously.
    mu = mu_p.reshape(B_pad, z_dim)[:B]
    sigma = sig_p.reshape(B_pad, z_dim)[:B]
    return mu, sigma


def _reference(s, w1, b1, wmu, bmu, wsig, bsig):
    hidden = jnp.maximum(s @ w1 + b1, 0.0)
    mu = hidden @ wmu + bmu
    sigma = POSTERIOR_STD_BIAS + 0.9 * jax.nn.sigmoid(hidden @ wsig + bsig)
    return mu, sigma


if __name__ == "__main__":
    # Small shapes consistent with the module: s_dim=32, z_dim=16, batch=8.
    B, S_DIM, Z_DIM = 8, 32, 16

    key = jax.random.PRNGKey(0)
    ks = jax.random.split(key, 9)

    s = jax.random.normal(ks[0], (B, S_DIM), dtype=jnp.float32)

    # Deterministic synthetic parameter init (uniform like PyTorch Linear).
    def init_linear(kw, kb, fan_in, fan_out):
        bound = 1.0 / jnp.sqrt(fan_in)
        w = jax.random.uniform(kw, (fan_in, fan_out), jnp.float32, -bound, bound)
        b = jax.random.uniform(kb, (1, fan_out), jnp.float32, -bound, bound)
        return w, b

    w1, b1 = init_linear(ks[1], ks[2], S_DIM, S_DIM)       # s_to_hidden
    wmu, bmu = init_linear(ks[3], ks[4], S_DIM, Z_DIM)     # hidden_to_mu
    wsig, bsig = init_linear(ks[5], ks[6], S_DIM, Z_DIM)   # hidden_to_sigma

    # 1) tiny batch (single packed block, grid = 1)
    mu, sigma = latent_normal_posterior_encoder(s, w1, b1, wmu, bmu, wsig, bsig)
    jax.block_until_ready((mu, sigma))
    mu_ref, sigma_ref = _reference(s, w1, b1, wmu, bmu, wsig, bsig)
    assert mu.shape == (B, Z_DIM) and sigma.shape == (B, Z_DIM)
    assert jnp.allclose(mu, mu_ref, atol=1e-5, rtol=1e-5)
    assert jnp.allclose(sigma, sigma_ref, atol=1e-5, rtol=1e-5)
    assert bool(jnp.all(sigma > 0.0))

    # 2) batch not a multiple of the pack factor (exercises the pad-to-p path)
    B2 = 20
    s2 = jax.random.normal(ks[7], (B2, S_DIM), dtype=jnp.float32)
    mu2, sigma2 = latent_normal_posterior_encoder(s2, w1, b1, wmu, bmu, wsig, bsig)
    jax.block_until_ready((mu2, sigma2))
    mu2_ref, sigma2_ref = _reference(s2, w1, b1, wmu, bmu, wsig, bsig)
    assert mu2.shape == (B2, Z_DIM) and sigma2.shape == (B2, Z_DIM)
    assert jnp.allclose(mu2, mu2_ref, atol=1e-5, rtol=1e-5)
    assert jnp.allclose(sigma2, sigma2_ref, atol=1e-5, rtol=1e-5)

    # 3) gridded path with a ragged last block (Bp=26, tm=16, grid=2) and
    #    B not a multiple of the pack factor.
    B3 = 204
    s3 = jax.random.normal(ks[8], (B3, S_DIM), dtype=jnp.float32)
    mu3, sigma3 = latent_normal_posterior_encoder(s3, w1, b1, wmu, bmu, wsig, bsig)
    jax.block_until_ready((mu3, sigma3))
    mu3_ref, sigma3_ref = _reference(s3, w1, b1, wmu, bmu, wsig, bsig)
    assert mu3.shape == (B3, Z_DIM) and sigma3.shape == (B3, Z_DIM)
    assert jnp.allclose(mu3, mu3_ref, atol=1e-5, rtol=1e-5)
    assert jnp.allclose(sigma3, sigma3_ref, atol=1e-5, rtol=1e-5)
    assert bool(jnp.all(sigma3 > 0.0))

    print("KERNEL_OK")
</pallas_src>

<mosaic_0001>
module attributes {stable_mosaic.version = 11 : i64} {
  func.func @_posterior_kernel(%arg0: i32, %arg1: memref<1x256xf32, #tpu.memory_space<vmem>>, %arg2: memref<256x256xf32, #tpu.memory_space<vmem>>, %arg3: memref<1x256xf32, #tpu.memory_space<vmem>>, %arg4: memref<256x256xf32, #tpu.memory_space<vmem>>, %arg5: memref<1x256xf32, #tpu.memory_space<vmem>>, %arg6: memref<1x128xf32, #tpu.memory_space<vmem>>, %arg7: memref<1x128xf32, #tpu.memory_space<vmem>>) attributes {dimension_semantics = [#tpu.dimension_semantics<parallel>], iteration_bounds = array<i64: 1>, scalar_prefetch = 0 : i64, scratch_operands = 0 : i64, tpu.core_type = #tpu.core_type<tc>, window_params = [{transform_indices = @transform_0, window_bounds = array<i64: 1, 256>}, {pipeline_mode = #tpu.pipeline_mode<synchronous>, transform_indices = @transform_1, window_bounds = array<i64: 256, 256>}, {pipeline_mode = #tpu.pipeline_mode<synchronous>, transform_indices = @transform_2, window_bounds = array<i64: 1, 256>}, {pipeline_mode = #tpu.pipeline_mode<synchronous>, transform_indices = @transform_3, window_bounds = array<i64: 256, 256>}, {pipeline_mode = #tpu.pipeline_mode<synchronous>, transform_indices = @transform_4, window_bounds = array<i64: 1, 256>}, {transform_indices = @transform_5, window_bounds = array<i64: 1, 128>}, {transform_indices = @transform_6, window_bounds = array<i64: 1, 128>}]} {
    %c0 = arith.constant 0 : index
    %c0_0 = arith.constant 0 : index
    %0 = vector.load %arg1[%c0, %c0_0] : memref<1x256xf32, #tpu.memory_space<vmem>>, vector<1x256xf32>
    %c0_1 = arith.constant 0 : index
    %c0_2 = arith.constant 0 : index
    %1 = vector.load %arg2[%c0_1, %c0_2] : memref<256x256xf32, #tpu.memory_space<vmem>>, vector<256x256xf32>
    %cst = arith.constant dense<0.000000e+00> : vector<1x256xf32>
    %2 = tpu.matmul %0, %1, %cst {dimension_numbers = #tpu.dot_dimension_numbers<[1], [0], [0], [1], [0, 0, 1, 1], [], []>} : vector<1x256xf32>, vector<256x256xf32>, vector<1x256xf32> -> vector<1x256xf32>
    %c0_3 = arith.constant 0 : index
    %c0_4 = arith.constant 0 : index
    %3 = vector.load %arg3[%c0_3, %c0_4] : memref<1x256xf32, #tpu.memory_space<vmem>>, vector<1x256xf32>
    %4 = arith.addf %2, %3 : vector<1x256xf32>
    %cst_5 = arith.constant 0.000000e+00 : f32
    %5 = vector.broadcast %cst_5 : f32 to vector<1x256xf32>
    %6 = arith.maximumf %4, %5 : vector<1x256xf32>
    %c0_6 = arith.constant 0 : index
    %c0_7 = arith.constant 0 : index
    %7 = vector.load %arg4[%c0_6, %c0_7] : memref<256x256xf32, #tpu.memory_space<vmem>>, vector<256x256xf32>
    %cst_8 = arith.constant dense<0.000000e+00> : vector<1x256xf32>
    %8 = tpu.matmul %6, %7, %cst_8 {dimension_numbers = #tpu.dot_dimension_numbers<[1], [0], [0], [1], [0, 0, 1, 1], [], []>} : vector<1x256xf32>, vector<256x256xf32>, vector<1x256xf32> -> vector<1x256xf32>
    %c0_9 = arith.constant 0 : index
    %c0_10 = arith.constant 0 : index
    %9 = vector.load %arg5[%c0_9, %c0_10] : memref<1x256xf32, #tpu.memory_space<vmem>>, vector<1x256xf32>
    %10 = arith.addf %8, %9 : vector<1x256xf32>
    %11 = vector.extract_strided_slice %10 {offsets = [0, 0], sizes = [1, 128], strides = [1, 1]} : vector<1x256xf32> to vector<1x128xf32>
    %c0_11 = arith.constant 0 : index
    %c0_12 = arith.constant 0 : index
    %12 = vector.load %arg6[%c0_11, %c0_12] : memref<1x128xf32, #tpu.memory_space<vmem>>, vector<1x128xf32>
    tpu.vector_store %arg6[%c0_11, %c0_12], %11 {strides = array<i32>} : memref<1x128xf32, #tpu.memory_space<vmem>>, vector<1x128xf32>,
    %13 = vector.extract_strided_slice %10 {offsets = [0, 128], sizes = [1, 128], strides = [1, 1]} : vector<1x256xf32> to vector<1x128xf32>
    %14 = arith.negf %13 : vector<1x128xf32>
    %15 = math.exp %14 : vector<1x128xf32>
    %cst_13 = arith.constant 1.000000e+00 : f32
    %16 = vector.broadcast %cst_13 : f32 to vector<1x128xf32>
    %17 = arith.addf %16, %15 : vector<1x128xf32>
    %18 = arith.divf %16, %17 : vector<1x128xf32>
    %cst_14 = arith.constant 0.899999976 : f32
    %19 = vector.broadcast %cst_14 : f32 to vector<1x128xf32>
    %20 = arith.mulf %19, %18 : vector<1x128xf32>
    %cst_15 = arith.constant 1.000000e-01 : f32
    %21 = vector.broadcast %cst_15 : f32 to vector<1x128xf32>
    %22 = arith.addf %21, %20 : vector<1x128xf32>
    %c0_16 = arith.constant 0 : index
    %c0_17 = arith.constant 0 : index
    %23 = vector.load %arg7[%c0_16, %c0_17] : memref<1x128xf32, #tpu.memory_space<vmem>>, vector<1x128xf32>
    tpu.vector_store %arg7[%c0_16, %c0_17], %22 {strides = array<i32>} : memref<1x128xf32, #tpu.memory_space<vmem>>, vector<1x128xf32>,
    return
  }
  func.func @transform_0(%arg0: i32) -> (i32, i32) {
    %c0_i32 = arith.constant 0 : i32
    %c0_i32_0 = arith.constant 0 : i32
    return %arg0, %c0_i32 : i32, i32
  }
  func.func @transform_1(%arg0: i32) -> (i32, i32) {
    %c0_i32 = arith.constant 0 : i32
    %c0_i32_0 = arith.constant 0 : i32
    %c0_i32_1 = arith.constant 0 : i32
    return %c0_i32, %c0_i32_0 : i32, i32
  }
  func.func @transform_2(%arg0: i32) -> (i32, i32) {
    %c0_i32 = arith.constant 0 : i32
    %c0_i32_0 = arith.constant 0 : i32
    %c0_i32_1 = arith.constant 0 : i32
    return %c0_i32, %c0_i32_0 : i32, i32
  }
  func.func @transform_3(%arg0: i32) -> (i32, i32) {
    %c0_i32 = arith.constant 0 : i32
    %c0_i32_0 = arith.constant 0 : i32
    %c0_i32_1 = arith.constant 0 : i32
    return %c0_i32, %c0_i32_0 : i32, i32
  }
  func.func @transform_4(%arg0: i32) -> (i32, i32) {
    %c0_i32 = arith.constant 0 : i32
    %c0_i32_0 = arith.constant 0 : i32
    %c0_i32_1 = arith.constant 0 : i32
    return %c0_i32, %c0_i32_0 : i32, i32
  }
  func.func @transform_5(%arg0: i32) -> (i32, i32) {
    %c0_i32 = arith.constant 0 : i32
    %c0_i32_0 = arith.constant 0 : i32
    return %arg0, %c0_i32 : i32, i32
  }
  func.func @transform_6(%arg0: i32) -> (i32, i32) {
    %c0_i32 = arith.constant 0 : i32
    %c0_i32_0 = arith.constant 0 : i32
    return %arg0, %c0_i32 : i32, i32
  }
}

</mosaic_0001>

<llo_original>
// kernel: latent_normal_posterior_encoder.1
$region0: #{latent_normal_posterior_encoder.1}
  #allocation0 [shape = 'u32[]', space=smem, size = 0x4, offset = 0x4, fixed_abs, tag = 'smem constant byte address 0x4 - core index']
  #allocation1 [shape = 'u32[144,128]{1,0:T(1,128)}', space=vmem, size = 0x12000, scoped, tag = 'internal scratch']
  %s0 = inlined_call_operand.vmem [shape: f32[1,256], index: 0, kind: input, shape index: {}]
  %s1 = inlined_call_operand.vmem [shape: f32[256,256], index: 1, kind: input, shape index: {}]
  %s2 = inlined_call_operand.vmem [shape: f32[1,256], index: 2, kind: input, shape index: {}]
  %s3 = inlined_call_operand.vmem [shape: f32[256,256], index: 3, kind: input, shape index: {}]
  %s4 = inlined_call_operand.vmem [shape: f32[1,256], index: 4, kind: input, shape index: {}]
  %s5 = inlined_call_operand.vmem [shape: f32[1,128], index: 5, kind: output, shape index: {0}]
  %s6 = inlined_call_operand.vmem [shape: f32[1,128], index: 6, kind: output, shape index: {1}]
  %7 = xla_tuple %s5, %s6
  %s8 = sld [smem:[#allocation0]]
  $region38: #{latent_normal_posterior_encoder.1} parent=0
    _
  %s10 = ssub.s32 1, %s8
  %s11 = scalar_select 0, %s10, %s8
  // Predicated region
  $region2: #{latent_normal_posterior_encoder.1} parent=0 // pred_check
    _
  $region3: #{latent_normal_posterior_encoder.1} parent=0 // pred_check_branch
    %13 = sbr.rel (0) target = $region5
  $region4: #{latent_normal_posterior_encoder.1} parent=0 // pred_region
    _
  $region5: #{latent_normal_posterior_encoder.1} parent=0 // pred_fallthru
    _
  // Predicated region
  $region6: #{latent_normal_posterior_encoder.1} parent=0 // pred_check
    _
  $region7: #{latent_normal_posterior_encoder.1} parent=0 // pred_check_branch
    %15 = sbr.rel (0) target = $region9
  $region8: #{latent_normal_posterior_encoder.1} parent=0 // pred_region
    _
  $region9: #{latent_normal_posterior_encoder.1} parent=0 // pred_fallthru
    _
  // Predicated region
  $region10: #{latent_normal_posterior_encoder.1} parent=0 // pred_check
    _
  $region11: #{latent_normal_posterior_encoder.1} parent=0 // pred_check_branch
    %17 = sbr.rel (0) target = $region13
  $region12: #{latent_normal_posterior_encoder.1} parent=0 // pred_region
    _
  $region13: #{latent_normal_posterior_encoder.1} parent=0 // pred_fallthru
    _
  // Predicated region
  $region14: #{latent_normal_posterior_encoder.1} parent=0 // pred_check
    _
  $region15: #{latent_normal_posterior_encoder.1} parent=0 // pred_check_branch
    %19 = sbr.rel (0) target = $region17
  $region16: #{latent_normal_posterior_encoder.1} parent=0 // pred_region
    _
  $region17: #{latent_normal_posterior_encoder.1} parent=0 // pred_fallthru
    _
  // Predicated region
  $region18: #{latent_normal_posterior_encoder.1} parent=0 // pred_check
    _
  $region19: #{latent_normal_posterior_encoder.1} parent=0 // pred_check_branch
    %21 = sbr.rel (0) target = $region21
  $region20: #{latent_normal_posterior_encoder.1} parent=0 // pred_region
    _
  $region21: #{latent_normal_posterior_encoder.1} parent=0 // pred_fallthru
    _
  %v22 = vld [vmem:[%s0] sm:$0x3]
  %v23 = vld [vmem:[%s1] sm:$0xff]
  %v24 = vld [vmem:[%s1 + $0x8] sm:$0xff]
  %v25 = vld [vmem:[%s1 + $0x10] sm:$0xff]
  %v26 = vld [vmem:[%s1 + $0x18] sm:$0xff]
  %v27 = vld [vmem:[%s1 + $0x20] sm:$0xff]
  %v28 = vld [vmem:[%s1 + $0x28] sm:$0xff]
  %v29 = vld [vmem:[%s1 + $0x30] sm:$0xff]
  %v30 = vld [vmem:[%s1 + $0x38] sm:$0xff]
  %v31 = vld [vmem:[%s1 + $0x40] sm:$0xff]
  %v32 = vld [vmem:[%s1 + $0x48] sm:$0xff]
  %v33 = vld [vmem:[%s1 + $0x50] sm:$0xff]
  %v34 = vld [vmem:[%s1 + $0x58] sm:$0xff]
  %v35 = vld [vmem:[%s1 + $0x60] sm:$0xff]
  %v36 = vld [vmem:[%s1 + $0x68] sm:$0xff]
  %v37 = vld [vmem:[%s1 + $0x70] sm:$0xff]
  %v38 = vld [vmem:[%s1 + $0x78] sm:$0xff]
  %v39 = vld [vmem:[%s1 + $0x80] sm:$0xff]
  %v40 = vld [vmem:[%s1 + $0x88] sm:$0xff]
  %v41 = vld [vmem:[%s1 + $0x90] sm:$0xff]
  %v42 = vld [vmem:[%s1 + $0x98] sm:$0xff]
  %v43 = vld [vmem:[%s1 + $0xa0] sm:$0xff]
  %v44 = vld [vmem:[%s1 + $0xa8] sm:$0xff]
  %v45 = vld [vmem:[%s1 + $0xb0] sm:$0xff]
  %v46 = vld [vmem:[%s1 + $0xb8] sm:$0xff]
  %v47 = vld [vmem:[%s1 + $0xc0] sm:$0xff]
  %v48 = vld [vmem:[%s1 + $0xc8] sm:$0xff]
  %v49 = vld [vmem:[%s1 + $0xd0] sm:$0xff]
  %v50 = vld [vmem:[%s1 + $0xd8] sm:$0xff]
  %v51 = vld [vmem:[%s1 + $0xe0] sm:$0xff]
  %v52 = vld [vmem:[%s1 + $0xe8] sm:$0xff]
  %v53 = vld [vmem:[%s1 + $0xf0] sm:$0xff]
  %v54 = vld [vmem:[%s1 + $0xf8] sm:$0xff]
  %v55 = vld [vmem:[%s1 + $0x100] sm:$0xff]
  %v56 = vld [vmem:[%s1 + $0x108] sm:$0xff]
  %v57 = vld [vmem:[%s1 + $0x110] sm:$0xff]
  %v58 = vld [vmem:[%s1 + $0x118] sm:$0xff]
  %v59 = vld [vmem:[%s1 + $0x120] sm:$0xff]
  %v60 = vld [vmem:[%s1 + $0x128] sm:$0xff]
  %v61 = vld [vmem:[%s1 + $0x130] sm:$0xff]
  %v62 = vld [vmem:[%s1 + $0x138] sm:$0xff]
  %v63 = vld [vmem:[%s1 + $0x140] sm:$0xff]
  %v64 = vld [vmem:[%s1 + $0x148] sm:$0xff]
  %v65 = vld [vmem:[%s1 + $0x150] sm:$0xff]
  %v66 = vld [vmem:[%s1 + $0x158] sm:$0xff]
  %v67 = vld [vmem:[%s1 + $0x160] sm:$0xff]
  %v68 = vld [vmem:[%s1 + $0x168] sm:$0xff]
  %v69 = vld [vmem:[%s1 + $0x170] sm:$0xff]
  %v70 = vld [vmem:[%s1 + $0x178] sm:$0xff]
  %v71 = vld [vmem:[%s1 + $0x180] sm:$0xff]
  %v72 = vld [vmem:[%s1 + $0x188] sm:$0xff]
  %v73 = vld [vmem:[%s1 + $0x190] sm:$0xff]
  %v74 = vld [vmem:[%s1 + $0x198] sm:$0xff]
  %v75 = vld [vmem:[%s1 + $0x1a0] sm:$0xff]
  %v76 = vld [vmem:[%s1 + $0x1a8] sm:$0xff]
  %v77 = vld [vmem:[%s1 + $0x1b0] sm:$0xff]
  %v78 = vld [vmem:[%s1 + $0x1b8] sm:$0xff]
  %v79 = vld [vmem:[%s1 + $0x1c0] sm:$0xff]
  %v80 = vld [vmem:[%s1 + $0x1c8] sm:$0xff]
  %v81 = vld [vmem:[%s1 + $0x1d0] sm:$0xff]
  %v82 = vld [vmem:[%s1 + $0x1d8] sm:$0xff]
  %v83 = vld [vmem:[%s1 + $0x1e0] sm:$0xff]
  %v84 = vld [vmem:[%s1 + $0x1e8] sm:$0xff]
  %v85 = vld [vmem:[%s1 + $0x1f0] sm:$0xff]
  %v86 = vld [vmem:[%s1 + $0x1f8] sm:$0xff]
  %v87 = vld [vmem:[%s2] sm:$0x3]
  %v89 = vlaneseq
  %v90 = vshrl.u32 %v89, 7
  %v91 = vsub.s32 0, %v90
  %v92 = vrot.slane %v22, %v91
  %v93 = vlaneseq
  %v94 = vshrl.u32 %v93, 7
  %v95 = vsub.s32 1, %v94
  %v96 = vrot.slane %v22, %v95
  %v100 = vlaneseq
  %v101 = vshrl.u32 %v100, 7
  %v102 = vsub.s32 0, %v101
  %v103 = vrot.slane %v87, %v102
  %v104 = vlaneseq
  %v105 = vshrl.u32 %v104, 7
  %v106 = vsub.s32 1, %v105
  %v107 = vrot.slane %v87, %v106
  %110 = vmatprep.subr.mxu0 %v24
  %111 = vmatpush1.msra.mxu0 %v23
  %112 = vmatprep.subr.mxu0 %v26
  %113 = vmatpush1.msra.mxu0 %v25
  %114 = vmatprep.subr.mxu0 %v28
  %115 = vmatpush1.msra.mxu0 %v27
  %116 = vmatprep.subr.mxu0 %v30
  %117 = vmatpush1.msra.mxu0 %v29
  %118 = vmatprep.subr.mxu0 %v32
  %119 = vmatpush1.msra.mxu0 %v31
  %120 = vmatprep.subr.mxu0 %v34
  %121 = vmatpush1.msra.mxu0 %v33
  %122 = vmatprep.subr.mxu0 %v36
  %123 = vmatpush1.msra.mxu0 %v35
  %124 = vmatprep.subr.mxu0 %v38
  %125 = vmatpush1.msra.mxu0 %v37
  %126 = vmatprep.subr.mxu0 %v40
  %127 = vmatpush1.msra.mxu0 %v39
  %128 = vmatprep.subr.mxu0 %v42
  %129 = vmatpush1.msra.mxu0 %v41
  %130 = vmatprep.subr.mxu0 %v44
  %131 = vmatpush1.msra.mxu0 %v43
  %132 = vmatprep.subr.mxu0 %v46
  %133 = vmatpush1.msra.mxu0 %v45
  %134 = vmatprep.subr.mxu0 %v48
  %135 = vmatpush1.msra.mxu0 %v47
  %136 = vmatprep.subr.mxu0 %v50
  %137 = vmatpush1.msra.mxu0 %v49
  %138 = vmatprep.subr.mxu0 %v52
  %139 = vmatpush1.msra.mxu0 %v51
  %140 = vmatprep.subr.mxu0 %v54
  %141 = vmatpush1.msra.mxu0 %v53
  %142 = vmatprep.subr.mxu0 %v56
  %143 = vmatpush1.msra.mxu0 %v55
  %144 = vmatprep.subr.mxu0 %v58
  %145 = vmatpush1.msra.mxu0 %v57
  %146 = vmatprep.subr.mxu0 %v60
  %147 = vmatpush1.msra.mxu0 %v59
  %148 = vmatprep.subr.mxu0 %v62
  %149 = vmatpush1.msra.mxu0 %v61
  %150 = vmatprep.subr.mxu0 %v64
  %151 = vmatpush1.msra.mxu0 %v63
  %152 = vmatprep.subr.mxu0 %v66
  %153 = vmatpush1.msra.mxu0 %v65
  %154 = vmatprep.subr.mxu0 %v68
  %155 = vmatpush1.msra.mxu0 %v67
  %156 = vmatprep.subr.mxu0 %v70
  %157 = vmatpush1.msra.mxu0 %v69
  %158 = vmatprep.subr.mxu0 %v72
  %159 = vmatpush1.msra.mxu0 %v71
  %160 = vmatprep.subr.mxu0 %v74
  %161 = vmatpush1.msra.mxu0 %v73
  %162 = vmatprep.subr.mxu0 %v76
  %163 = vmatpush1.msra.mxu0 %v75
  %164 = vmatprep.subr.mxu0 %v78
  %165 = vmatpush1.msra.mxu0 %v77
  %166 = vmatprep.subr.mxu0 %v80
  %167 = vmatpush1.msra.mxu0 %v79
  %168 = vmatprep.subr.mxu0 %v82
  %169 = vmatpush1.msra.mxu0 %v81
  %170 = vmatprep.subr.mxu0 %v84
  %171 = vmatpush1.msra.mxu0 %v83
  %172 = vmatprep.subr.mxu0 %v86
  %173 = vmatpush1.msra.mxu0 %v85
  %174 = vmatprep.mubr.f32.mxu0 %v96
  %175 = vmatmul.mubr.f32.gmra.mrb[0].mxu0 %v92
  %v176 = vpop.f32.mrb[0].mxu0
  %v177 = vadd.f32 %v103, %v176
  %v178 = vpop.f32.mrb[0].mxu0
  %v179 = vadd.f32 %v107, %v178
  %180 = vdwg.mxu0
  %v181 = vmax.f32 %v177, 0.0
  %v182 = vmax.f32 %v179, 0.0
  %v183 = vld [vmem:[%s3] sm:$0xff]
  %v184 = vld [vmem:[%s3 + $0x8] sm:$0xff]
  %v185 = vld [vmem:[%s3 + $0x10] sm:$0xff]
  %v186 = vld [vmem:[%s3 + $0x18] sm:$0xff]
  %v187 = vld [vmem:[%s3 + $0x20] sm:$0xff]
  %v188 = vld [vmem:[%s3 + $0x28] sm:$0xff]
  %v189 = vld [vmem:[%s3 + $0x30] sm:$0xff]
  %v190 = vld [vmem:[%s3 + $0x38] sm:$0xff]
  %v191 = vld [vmem:[%s3 + $0x40] sm:$0xff]
  %v192 = vld [vmem:[%s3 + $0x48] sm:$0xff]
  %v193 = vld [vmem:[%s3 + $0x50] sm:$0xff]
  %v194 = vld [vmem:[%s3 + $0x58] sm:$0xff]
  %v195 = vld [vmem:[%s3 + $0x60] sm:$0xff]
  %v196 = vld [vmem:[%s3 + $0x68] sm:$0xff]
  %v197 = vld [vmem:[%s3 + $0x70] sm:$0xff]
  %v198 = vld [vmem:[%s3 + $0x78] sm:$0xff]
  %v199 = vld [vmem:[%s3 + $0x80] sm:$0xff]
  %v200 = vld [vmem:[%s3 + $0x88] sm:$0xff]
  %v201 = vld [vmem:[%s3 + $0x90] sm:$0xff]
  %v202 = vld [vmem:[%s3 + $0x98] sm:$0xff]
  %v203 = vld [vmem:[%s3 + $0xa0] sm:$0xff]
  %v204 = vld [vmem:[%s3 + $0xa8] sm:$0xff]
  %v205 = vld [vmem:[%s3 + $0xb0] sm:$0xff]
  %v206 = vld [vmem:[%s3 + $0xb8] sm:$0xff]
  %v207 = vld [vmem:[%s3 + $0xc0] sm:$0xff]
  %v208 = vld [vmem:[%s3 + $0xc8] sm:$0xff]
  %v209 = vld [vmem:[%s3 + $0xd0] sm:$0xff]
  %v210 = vld [vmem:[%s3 + $0xd8] sm:$0xff]
  %v211 = vld [vmem:[%s3 + $0xe0] sm:$0xff]
  %v212 = vld [vmem:[%s3 + $0xe8] sm:$0xff]
  %v213 = vld [vmem:[%s3 + $0xf0] sm:$0xff]
  %v214 = vld [vmem:[%s3 + $0xf8] sm:$0xff]
  %v215 = vld [vmem:[%s3 + $0x100] sm:$0xff]
  %v216 = vld [vmem:[%s3 + $0x108] sm:$0xff]
  %v217 = vld [vmem:[%s3 + $0x110] sm:$0xff]
  %v218 = vld [vmem:[%s3 + $0x118] sm:$0xff]
  %v219 = vld [vmem:[%s3 + $0x120] sm:$0xff]
  %v220 = vld [vmem:[%s3 + $0x128] sm:$0xff]
  %v221 = vld [vmem:[%s3 + $0x130] sm:$0xff]
  %v222 = vld [vmem:[%s3 + $0x138] sm:$0xff]
  %v223 = vld [vmem:[%s3 + $0x140] sm:$0xff]
  %v224 = vld [vmem:[%s3 + $0x148] sm:$0xff]
  %v225 = vld [vmem:[%s3 + $0x150] sm:$0xff]
  %v226 = vld [vmem:[%s3 + $0x158] sm:$0xff]
  %v227 = vld [vmem:[%s3 + $0x160] sm:$0xff]
  %v228 = vld [vmem:[%s3 + $0x168] sm:$0xff]
  %v229 = vld [vmem:[%s3 + $0x170] sm:$0xff]
  %v230 = vld [vmem:[%s3 + $0x178] sm:$0xff]
  %v231 = vld [vmem:[%s3 + $0x180] sm:$0xff]
  %v232 = vld [vmem:[%s3 + $0x188] sm:$0xff]
  %v233 = vld [vmem:[%s3 + $0x190] sm:$0xff]
  %v234 = vld [vmem:[%s3 + $0x198] sm:$0xff]
  %v235 = vld [vmem:[%s3 + $0x1a0] sm:$0xff]
  %v236 = vld [vmem:[%s3 + $0x1a8] sm:$0xff]
  %v237 = vld [vmem:[%s3 + $0x1b0] sm:$0xff]
  %v238 = vld [vmem:[%s3 + $0x1b8] sm:$0xff]
  %v239 = vld [vmem:[%s3 + $0x1c0] sm:$0xff]
  %v240 = vld [vmem:[%s3 + $0x1c8] sm:$0xff]
  %v241 = vld [vmem:[%s3 + $0x1d0] sm:$0xff]
  %v242 = vld [vmem:[%s3 + $0x1d8] sm:$0xff]
  %v243 = vld [vmem:[%s3 + $0x1e0] sm:$0xff]
  %v244 = vld [vmem:[%s3 + $0x1e8] sm:$0xff]
  %v245 = vld [vmem:[%s3 + $0x1f0] sm:$0xff]
  %v246 = vld [vmem:[%s3 + $0x1f8] sm:$0xff]
  %v247 = vld [vmem:[%s4] sm:$0x3]
  %v249 = vlaneseq
  %v250 = vshrl.u32 %v249, 7
  %v251 = vsub.s32 0, %v250
  %v252 = vrot.slane %v247, %v251
  %v253 = vlaneseq
  %v254 = vshrl.u32 %v253, 7
  %v255 = vsub.s32 1, %v254
  %v256 = vrot.slane %v247, %v255
  %259 = vmatprep.subr.mxu0 %v184
  %260 = vmatpush1.msra.mxu0 %v183
  %261 = vmatprep.subr.mxu0 %v186
  %262 = vmatpush1.msra.mxu0 %v185
  %263 = vmatprep.subr.mxu0 %v188
  %264 = vmatpush1.msra.mxu0 %v187
  %265 = vmatprep.subr.mxu0 %v190
  %266 = vmatpush1.msra.mxu0 %v189
  %267 = vmatprep.subr.mxu0 %v192
  %268 = vmatpush1.msra.mxu0 %v191
  %269 = vmatprep.subr.mxu0 %v194
  %270 = vmatpush1.msra.mxu0 %v193
  %271 = vmatprep.subr.mxu0 %v196
  %272 = vmatpush1.msra.mxu0 %v195
  %273 = vmatprep.subr.mxu0 %v198
  %274 = vmatpush1.msra.mxu0 %v197
  %275 = vmatprep.subr.mxu0 %v200
  %276 = vmatpush1.msra.mxu0 %v199
  %277 = vmatprep.subr.mxu0 %v202
  %278 = vmatpush1.msra.mxu0 %v201
  %279 = vmatprep.subr.mxu0 %v204
  %280 = vmatpush1.msra.mxu0 %v203
  %281 = vmatprep.subr.mxu0 %v206
  %282 = vmatpush1.msra.mxu0 %v205
  %283 = vmatprep.subr.mxu0 %v208
  %284 = vmatpush1.msra.mxu0 %v207
  %285 = vmatprep.subr.mxu0 %v210
  %286 = vmatpush1.msra.mxu0 %v209
  %287 = vmatprep.subr.mxu0 %v212
  %288 = vmatpush1.msra.mxu0 %v211
  %289 = vmatprep.subr.mxu0 %v214
  %290 = vmatpush1.msra.mxu0 %v213
  %291 = vmatprep.subr.mxu0 %v216
  %292 = vmatpush1.msra.mxu0 %v215
  %293 = vmatprep.subr.mxu0 %v218
  %294 = vmatpush1.msra.mxu0 %v217
  %295 = vmatprep.subr.mxu0 %v220
  %296 = vmatpush1.msra.mxu0 %v219
  %297 = vmatprep.subr.mxu0 %v222
  %298 = vmatpush1.msra.mxu0 %v221
  %299 = vmatprep.subr.mxu0 %v224
  %300 = vmatpush1.msra.mxu0 %v223
  %301 = vmatprep.subr.mxu0 %v226
  %302 = vmatpush1.msra.mxu0 %v225
  %303 = vmatprep.subr.mxu0 %v228
  %304 = vmatpush1.msra.mxu0 %v227
  %305 = vmatprep.subr.mxu0 %v230
  %306 = vmatpush1.msra.mxu0 %v229
  %307 = vmatprep.subr.mxu0 %v232
  %308 = vmatpush1.msra.mxu0 %v231
  %309 = vmatprep.subr.mxu0 %v234
  %310 = vmatpush1.msra.mxu0 %v233
  %311 = vmatprep.subr.mxu0 %v236
  %312 = vmatpush1.msra.mxu0 %v235
  %313 = vmatprep.subr.mxu0 %v238
  %314 = vmatpush1.msra.mxu0 %v237
  %315 = vmatprep.subr.mxu0 %v240
  %316 = vmatpush1.msra.mxu0 %v239
  %317 = vmatprep.subr.mxu0 %v242
  %318 = vmatpush1.msra.mxu0 %v241
  %319 = vmatprep.subr.mxu0 %v244
  %320 = vmatpush1.msra.mxu0 %v243
  %321 = vmatprep.subr.mxu0 %v246
  %322 = vmatpush1.msra.mxu0 %v245
  %323 = vmatprep.mubr.f32.mxu0 %v182
  %324 = vmatmul.mubr.f32.gmra.mrb[0].mxu0 %v181
  %v325 = vpop.f32.mrb[0].mxu0
  %v326 = vadd.f32 %v252, %v325
  %v327 = vpop.f32.mrb[0].mxu0
  %v328 = vadd.f32 %v256, %v327
  %329 = vdwg.mxu0
  %330 = vst [vmem:[%s5] sm:$0x1] %v326
  %v331 = vxor.u32 %v328, 2147483648
  %v332 = vmul.f32 %v331, 1.442695
  %v333 = vpow.pop %v332
  %v334 = vadd.f32 %v333, 1.0
  %v335 = vrcp.pop %v334
  %v336 = vmul.f32 1.0, %v335
  %v337 = vmul.f32 %v336, 0.9
  %v338 = vadd.f32 %v337, 0.1
  %339 = vst [vmem:[%s6] sm:$0x1] %v338
  // Predicated region
  $region22: #{latent_normal_posterior_encoder.1} parent=0 // pred_check
    _
  $region23: #{latent_normal_posterior_encoder.1} parent=0 // pred_check_branch
    %341 = sbr.rel (0) target = $region25
  $region24: #{latent_normal_posterior_encoder.1} parent=0 // pred_region
    _
  $region25: #{latent_normal_posterior_encoder.1} parent=0 // pred_fallthru
    _
  // Predicated region
  $region26: #{latent_normal_posterior_encoder.1} parent=0 // pred_check
    _
  $region27: #{latent_normal_posterior_encoder.1} parent=0 // pred_check_branch
    %343 = sbr.rel (0) target = $region29
  $region28: #{latent_normal_posterior_encoder.1} parent=0 // pred_region
    _
  $region29: #{latent_normal_posterior_encoder.1} parent=0 // pred_fallthru
    _
  // Predicated region
  $region30: #{latent_normal_posterior_encoder.1} parent=0 // pred_check
    _
  $region31: #{latent_normal_posterior_encoder.1} parent=0 // pred_check_branch
    %345 = sbr.rel (0) target = $region33
  $region32: #{latent_normal_posterior_encoder.1} parent=0 // pred_region
    _
  $region33: #{latent_normal_posterior_encoder.1} parent=0 // pred_fallthru
    _
  // Predicated region
  $region34: #{latent_normal_posterior_encoder.1} parent=0 // pred_check
    _
  $region35: #{latent_normal_posterior_encoder.1} parent=0 // pred_check_branch
    %347 = sbr.rel (0) target = $region37
  $region36: #{latent_normal_posterior_encoder.1} parent=0 // pred_region
    _
  $region37: #{latent_normal_posterior_encoder.1} parent=0 // pred_fallthru
    _

</llo_original>
